<compile_context>
chip_gen: v7x
topology: tpu7x:2x2x1
jax: 0.10.0
libtpu: 0.0.40
codegen_flags: <defaults>
</compile_context>

<pallas_src>
import jax
import jax.numpy as jnp
from jax.experimental import pallas as pl
from jax.experimental.pallas import tpu as pltpu


def _se_fusion_kernel(rgb_ref, depth_ref,
                      w1r_ref, b1r_ref, w2r_ref, b2r_ref,
                      w1d_ref, b1d_ref, w2d_ref, b2d_ref,
                      out_ref):
    """One batch element per grid step; blocks are (1, C, HW).

    Layout: C on sublanes, H*W on lanes (lane-dense streaming).
    SE MLP runs on VPU/XLU only:
        pooled (C,1) --sublane-reduce--> h (1,Cr) --lane-reduce--> s (C,1)
    and s broadcasts over lanes for the channel-wise scale.
    """
    rgb = rgb_ref[0]      # (C, HW) in storage dtype
    depth = depth_ref[0]  # (C, HW)

    def se_scale(x, w1, b1, w2t, b2):
        # adaptive_avg_pool2d(x, 1): mean over spatial lanes (XLU lane reduce).
        pooled = jnp.mean(x, axis=1, keepdims=True).astype(jnp.float32)   # (C, 1)
        # 1x1 conv C -> C//r (+ReLU): broadcast-mul + sublane reduce (no MXU).
        h = jnp.sum(pooled * w1, axis=0, keepdims=True) + b1              # (1, Cr)
        h = jnp.maximum(h, 0.0)
        # 1x1 conv C//r -> C (+Sigmoid): broadcast-mul + lane reduce.
        s = jnp.sum(h * w2t, axis=1, keepdims=True) + b2                  # (C, 1)
        return jax.nn.sigmoid(s)                                          # (C, 1)

    s_rgb = se_scale(rgb, w1r_ref[...], b1r_ref[...], w2r_ref[...], b2r_ref[...])
    s_dep = se_scale(depth, w1d_ref[...], b1d_ref[...], w2d_ref[...], b2d_ref[...])

    # Channel-wise scale (broadcast over HW lanes) + fused add, arithmetic in
    # f32 vregs (edges cast only when storage dtype is narrower).
    out = rgb * s_rgb + depth * s_dep                                     # (C, HW)
    out_ref[0] = out.astype(out_ref.dtype)


def se_fusion_add(rgb_nchw, depth_nchw, params):
    """rgb/depth in NCHW (PyTorch convention). Returns NCHW output (same dtype)."""
    N, C, H, W = rgb_nchw.shape
    HW = H * W

    # Free reshapes (contiguous view): (N, C, H, W) -> (N, C, HW). No transpose,
    # no extra HBM pass. Best perf when HW is a multiple of 128 and C of 8.
    rgb = rgb_nchw.reshape(N, C, HW)
    depth = depth_nchw.reshape(N, C, HW)

    (w1r, b1r, w2r, b2r, w1d, b1d, w2d, b2d) = params
    Cr = w1r.shape[1]

    full = lambda shape: pl.BlockSpec(shape, lambda n: (0,) * len(shape))
    big = lambda: pl.BlockSpec((1, C, HW), lambda n: (n, 0, 0))

    # VMEM budget: 2 inputs + 1 output blocks, double-buffered, + params/temps.
    itemsize = jnp.dtype(rgb.dtype).itemsize
    block_bytes = C * HW * itemsize
    vmem_limit = int(min(max(8 * block_bytes + (2 << 20), 16 << 20), 100 << 20))
    # TODO(synk): for very large C*HW (e.g. C=512, HW>=4096 on v7x's 64 MiB
    # VMEM) switch to a two-phase plan: a small pool/MLP pass producing (N, C)
    # scales, then a tiled lane-dense scale-add kernel over HW chunks.

    out = pl.pallas_call(
        _se_fusion_kernel,
        out_shape=jax.ShapeDtypeStruct((N, C, HW), rgb.dtype),
        grid_spec=pltpu.PrefetchScalarGridSpec(
            num_scalar_prefetch=0,
            grid=(N,),
            in_specs=[
                big(),   # rgb
                big(),   # depth
                # rgb SE params: w1 (C,Cr), b1 (1,Cr), w2^T (C,Cr), b2 (C,1)
                full((C, Cr)), full((1, Cr)), full((C, Cr)), full((C, 1)),
                # depth SE params
                full((C, Cr)), full((1, Cr)), full((C, Cr)), full((C, 1)),
            ],
            out_specs=big(),
        ),
        compiler_params=pltpu.CompilerParams(
            dimension_semantics=("parallel",),
            vmem_limit_bytes=vmem_limit),
    )(rgb, depth, w1r, b1r, w2r, b2r, w1d, b1d, w2d, b2d)

    # Free view back to NCHW.
    return out.reshape(N, C, H, W)


def init_params(key, channels, reduction=16):
    """Deterministic synthetic params matching nn.Conv2d(k=1) weight shapes.

    PyTorch conv1 weight is (Cr, C, 1, 1) -> stored transposed as (C, Cr);
    conv2 weight is (C, Cr, 1, 1) -> stored as (C, Cr) directly (i.e. w2^T);
    conv2 bias stored as (C, 1) so it broadcasts over lanes in the kernel.
    """
    cr = channels // reduction
    ks = jax.random.split(key, 8)
    scale1 = 1.0 / jnp.sqrt(channels)
    scale2 = 1.0 / jnp.sqrt(cr)
    w1r = jax.random.normal(ks[0], (channels, cr), jnp.float32) * scale1
    b1r = jax.random.normal(ks[1], (1, cr), jnp.float32) * scale1
    w2r = jax.random.normal(ks[2], (channels, cr), jnp.float32) * scale2   # w2^T
    b2r = jax.random.normal(ks[3], (channels, 1), jnp.float32) * scale2
    w1d = jax.random.normal(ks[4], (channels, cr), jnp.float32) * scale1
    b1d = jax.random.normal(ks[5], (1, cr), jnp.float32) * scale1
    w2d = jax.random.normal(ks[6], (channels, cr), jnp.float32) * scale2   # w2^T
    b2d = jax.random.normal(ks[7], (channels, 1), jnp.float32) * scale2
    return (w1r, b1r, w2r, b2r, w1d, b1d, w2d, b2d)


def _reference(rgb, depth, params):
    """Pure-JAX reference mirroring the PyTorch forward (NCHW)."""
    (w1r, b1r, w2r, b2r, w1d, b1d, w2d, b2d) = params

    def se(x, w1, b1, w2t, b2):
        pooled = jnp.mean(x, axis=(2, 3))                        # (N, C)
        h = jnp.maximum(pooled @ w1 + b1, 0.0)                   # (N, Cr)
        s = jax.nn.sigmoid(h @ w2t.T + b2.reshape(1, -1))        # (N, C)
        return x * s[:, :, None, None]

    return se(rgb, w1r, b1r, w2r, b2r) + se(depth, w1d, b1d, w2d, b2d)


if __name__ == "__main__":
    N, C, H, W = 2, 32, 16, 16   # channels must be >= reduction (16); HW = 256
    key = jax.random.PRNGKey(0)
    k_rgb, k_depth, k_params = jax.random.split(key, 3)
    rgb = jax.random.normal(k_rgb, (N, C, H, W), jnp.float32)
    depth = jax.random.normal(k_depth, (N, C, H, W), jnp.float32)
    params = init_params(k_params, C, reduction=16)

    out = se_fusion_add(rgb, depth, params)
    out = jax.block_until_ready(out)

    ref = _reference(rgb, depth, params)
    assert out.shape == (N, C, H, W)
    assert out.dtype == rgb.dtype
    assert jnp.allclose(out, ref, atol=1e-5, rtol=1e-5)
    print("KERNEL_OK")
</pallas_src>

<mosaic_0001>
module attributes {stable_mosaic.version = 11 : i64} {
  func.func @_se_fusion_kernel(%arg0: i32, %arg1: memref<1x32x256xf32, #tpu.memory_space<vmem>>, %arg2: memref<1x32x256xf32, #tpu.memory_space<vmem>>, %arg3: memref<32x2xf32, #tpu.memory_space<vmem>>, %arg4: memref<1x2xf32, #tpu.memory_space<vmem>>, %arg5: memref<32x2xf32, #tpu.memory_space<vmem>>, %arg6: memref<32x1xf32, #tpu.memory_space<vmem>>, %arg7: memref<32x2xf32, #tpu.memory_space<vmem>>, %arg8: memref<1x2xf32, #tpu.memory_space<vmem>>, %arg9: memref<32x2xf32, #tpu.memory_space<vmem>>, %arg10: memref<32x1xf32, #tpu.memory_space<vmem>>, %arg11: memref<1x32x256xf32, #tpu.memory_space<vmem>>) attributes {dimension_semantics = [#tpu.dimension_semantics<parallel>], iteration_bounds = array<i64: 2>, scalar_prefetch = 0 : i64, scratch_operands = 0 : i64, tpu.core_type = #tpu.core_type<tc>, window_params = [{transform_indices = @transform_0, window_bounds = array<i64: 1, 32, 256>}, {transform_indices = @transform_1, window_bounds = array<i64: 1, 32, 256>}, {pipeline_mode = #tpu.pipeline_mode<synchronous>, transform_indices = @transform_2, window_bounds = array<i64: 32, 2>}, {pipeline_mode = #tpu.pipeline_mode<synchronous>, transform_indices = @transform_3, window_bounds = array<i64: 1, 2>}, {pipeline_mode = #tpu.pipeline_mode<synchronous>, transform_indices = @transform_4, window_bounds = array<i64: 32, 2>}, {pipeline_mode = #tpu.pipeline_mode<synchronous>, transform_indices = @transform_5, window_bounds = array<i64: 32, 1>}, {pipeline_mode = #tpu.pipeline_mode<synchronous>, transform_indices = @transform_6, window_bounds = array<i64: 32, 2>}, {pipeline_mode = #tpu.pipeline_mode<synchronous>, transform_indices = @transform_7, window_bounds = array<i64: 1, 2>}, {pipeline_mode = #tpu.pipeline_mode<synchronous>, transform_indices = @transform_8, window_bounds = array<i64: 32, 2>}, {pipeline_mode = #tpu.pipeline_mode<synchronous>, transform_indices = @transform_9, window_bounds = array<i64: 32, 1>}, {transform_indices = @transform_10, window_bounds = array<i64: 1, 32, 256>}]} {
    %c0 = arith.constant 0 : index
    %c0_0 = arith.constant 0 : index
    %c0_1 = arith.constant 0 : index
    %0 = vector.load %arg1[%c0, %c0_0, %c0_1] : memref<1x32x256xf32, #tpu.memory_space<vmem>>, vector<1x32x256xf32>
    %1 = vector.shape_cast %0 : vector<1x32x256xf32> to vector<32x256xf32>
    %c0_2 = arith.constant 0 : index
    %c0_3 = arith.constant 0 : index
    %c0_4 = arith.constant 0 : index
    %2 = vector.load %arg2[%c0_2, %c0_3, %c0_4] : memref<1x32x256xf32, #tpu.memory_space<vmem>>, vector<1x32x256xf32>
    %3 = vector.shape_cast %2 : vector<1x32x256xf32> to vector<32x256xf32>
    %c0_5 = arith.constant 0 : index
    %c0_6 = arith.constant 0 : index
    %4 = vector.load %arg3[%c0_5, %c0_6] : memref<32x2xf32, #tpu.memory_space<vmem>>, vector<32x2xf32>
    %c0_7 = arith.constant 0 : index
    %c0_8 = arith.constant 0 : index
    %5 = vector.load %arg4[%c0_7, %c0_8] : memref<1x2xf32, #tpu.memory_space<vmem>>, vector<1x2xf32>
    %c0_9 = arith.constant 0 : index
    %c0_10 = arith.constant 0 : index
    %6 = vector.load %arg5[%c0_9, %c0_10] : memref<32x2xf32, #tpu.memory_space<vmem>>, vector<32x2xf32>
    %c0_11 = arith.constant 0 : index
    %c0_12 = arith.constant 0 : index
    %7 = vector.load %arg6[%c0_11, %c0_12] : memref<32x1xf32, #tpu.memory_space<vmem>>, vector<32x1xf32>
    %cst = arith.constant dense<0.000000e+00> : vector<32xf32>
    %8 = vector.multi_reduction <add>, %1, %cst [1] : vector<32x256xf32> to vector<32xf32>
    %9 = vector.shape_cast %8 : vector<32xf32> to vector<32x1xf32>
    %cst_13 = arith.constant 2.560000e+02 : f32
    %10 = vector.broadcast %cst_13 : f32 to vector<32x1xf32>
    %11 = arith.divf %9, %10 : vector<32x1xf32>
    %12 = vector.broadcast %11 : vector<32x1xf32> to vector<32x2xf32>
    %13 = arith.mulf %12, %4 : vector<32x2xf32>
    %cst_14 = arith.constant dense<0.000000e+00> : vector<2xf32>
    %14 = vector.multi_reduction <add>, %13, %cst_14 [0] : vector<32x2xf32> to vector<2xf32>
    %15 = vector.shape_cast %14 : vector<2xf32> to vector<1x2xf32>
    %16 = arith.addf %15, %5 : vector<1x2xf32>
    %cst_15 = arith.constant 0.000000e+00 : f32
    %17 = vector.broadcast %cst_15 : f32 to vector<1x2xf32>
    %18 = arith.maximumf %16, %17 : vector<1x2xf32>
    %19 = vector.broadcast %18 : vector<1x2xf32> to vector<32x2xf32>
    %20 = arith.mulf %19, %6 : vector<32x2xf32>
    %cst_16 = arith.constant dense<0.000000e+00> : vector<32xf32>
    %21 = vector.multi_reduction <add>, %20, %cst_16 [1] : vector<32x2xf32> to vector<32xf32>
    %22 = vector.shape_cast %21 : vector<32xf32> to vector<32x1xf32>
    %23 = arith.addf %22, %7 : vector<32x1xf32>
    %24 = arith.negf %23 : vector<32x1xf32>
    %25 = math.exp %24 : vector<32x1xf32>
    %cst_17 = arith.constant 1.000000e+00 : f32
    %26 = vector.broadcast %cst_17 : f32 to vector<32x1xf32>
    %27 = arith.addf %26, %25 : vector<32x1xf32>
    %28 = arith.divf %26, %27 : vector<32x1xf32>
    %c0_18 = arith.constant 0 : index
    %c0_19 = arith.constant 0 : index
    %29 = vector.load %arg7[%c0_18, %c0_19] : memref<32x2xf32, #tpu.memory_space<vmem>>, vector<32x2xf32>
    %c0_20 = arith.constant 0 : index
    %c0_21 = arith.constant 0 : index
    %30 = vector.load %arg8[%c0_20, %c0_21] : memref<1x2xf32, #tpu.memory_space<vmem>>, vector<1x2xf32>
    %c0_22 = arith.constant 0 : index
    %c0_23 = arith.constant 0 : index
    %31 = vector.load %arg9[%c0_22, %c0_23] : memref<32x2xf32, #tpu.memory_space<vmem>>, vector<32x2xf32>
    %c0_24 = arith.constant 0 : index
    %c0_25 = arith.constant 0 : index
    %32 = vector.load %arg10[%c0_24, %c0_25] : memref<32x1xf32, #tpu.memory_space<vmem>>, vector<32x1xf32>
    %cst_26 = arith.constant dense<0.000000e+00> : vector<32xf32>
    %33 = vector.multi_reduction <add>, %3, %cst_26 [1] : vector<32x256xf32> to vector<32xf32>
    %34 = vector.shape_cast %33 : vector<32xf32> to vector<32x1xf32>
    %cst_27 = arith.constant 2.560000e+02 : f32
    %35 = vector.broadcast %cst_27 : f32 to vector<32x1xf32>
    %36 = arith.divf %34, %35 : vector<32x1xf32>
    %37 = vector.broadcast %36 : vector<32x1xf32> to vector<32x2xf32>
    %38 = arith.mulf %37, %29 : vector<32x2xf32>
    %cst_28 = arith.constant dense<0.000000e+00> : vector<2xf32>
    %39 = vector.multi_reduction <add>, %38, %cst_28 [0] : vector<32x2xf32> to vector<2xf32>
    %40 = vector.shape_cast %39 : vector<2xf32> to vector<1x2xf32>
    %41 = arith.addf %40, %30 : vector<1x2xf32>
    %cst_29 = arith.constant 0.000000e+00 : f32
    %42 = vector.broadcast %cst_29 : f32 to vector<1x2xf32>
    %43 = arith.maximumf %41, %42 : vector<1x2xf32>
    %44 = vector.broadcast %43 : vector<1x2xf32> to vector<32x2xf32>
    %45 = arith.mulf %44, %31 : vector<32x2xf32>
    %cst_30 = arith.constant dense<0.000000e+00> : vector<32xf32>
    %46 = vector.multi_reduction <add>, %45, %cst_30 [1] : vector<32x2xf32> to vector<32xf32>
    %47 = vector.shape_cast %46 : vector<32xf32> to vector<32x1xf32>
    %48 = arith.addf %47, %32 : vector<32x1xf32>
    %49 = arith.negf %48 : vector<32x1xf32>
    %50 = math.exp %49 : vector<32x1xf32>
    %cst_31 = arith.constant 1.000000e+00 : f32
    %51 = vector.broadcast %cst_31 : f32 to vector<32x1xf32>
    %52 = arith.addf %51, %50 : vector<32x1xf32>
    %53 = arith.divf %51, %52 : vector<32x1xf32>
    %54 = vector.broadcast %28 : vector<32x1xf32> to vector<32x256xf32>
    %55 = arith.mulf %1, %54 : vector<32x256xf32>
    %56 = vector.broadcast %53 : vector<32x1xf32> to vector<32x256xf32>
    %57 = arith.mulf %3, %56 : vector<32x256xf32>
    %58 = arith.addf %55, %57 : vector<32x256xf32>
    %c0_32 = arith.constant 0 : index
    %c0_33 = arith.constant 0 : index
    %c0_34 = arith.constant 0 : index
    %59 = vector.load %arg11[%c0_32, %c0_33, %c0_34] : memref<1x32x256xf32, #tpu.memory_space<vmem>>, vector<1x32x256xf32>
    %60 = vector.shape_cast %59 : vector<1x32x256xf32> to vector<32x256xf32>
    %61 = vector.shape_cast %58 : vector<32x256xf32> to vector<1x32x256xf32>
    tpu.vector_store %arg11[%c0_32, %c0_33, %c0_34], %61 {strides = array<i32>} : memref<1x32x256xf32, #tpu.memory_space<vmem>>, vector<1x32x256xf32>,
    return
  }
  func.func @transform_0(%arg0: i32) -> (i32, i32, i32) {
    %c0_i32 = arith.constant 0 : i32
    %c0_i32_0 = arith.constant 0 : i32
    %c0_i32_1 = arith.constant 0 : i32
    return %arg0, %c0_i32, %c0_i32_0 : i32, i32, i32
  }
  func.func @transform_1(%arg0: i32) -> (i32, i32, i32) {
    %c0_i32 = arith.constant 0 : i32
    %c0_i32_0 = arith.constant 0 : i32
    %c0_i32_1 = arith.constant 0 : i32
    return %arg0, %c0_i32, %c0_i32_0 : i32, i32, i32
  }
  func.func @transform_2(%arg0: i32) -> (i32, i32) {
    %c0_i32 = arith.constant 0 : i32
    %c0_i32_0 = arith.constant 0 : i32
    %c0_i32_1 = arith.constant 0 : i32
    return %c0_i32, %c0_i32_0 : i32, i32
  }
  func.func @transform_3(%arg0: i32) -> (i32, i32) {
    %c0_i32 = arith.constant 0 : i32
    %c0_i32_0 = arith.constant 0 : i32
    %c0_i32_1 = arith.constant 0 : i32
    return %c0_i32, %c0_i32_0 : i32, i32
  }
  func.func @transform_4(%arg0: i32) -> (i32, i32) {
    %c0_i32 = arith.constant 0 : i32
    %c0_i32_0 = arith.constant 0 : i32
    %c0_i32_1 = arith.constant 0 : i32
    return %c0_i32, %c0_i32_0 : i32, i32
  }
  func.func @transform_5(%arg0: i32) -> (i32, i32) {
    %c0_i32 = arith.constant 0 : i32
    %c0_i32_0 = arith.constant 0 : i32
    %c0_i32_1 = arith.constant 0 : i32
    return %c0_i32, %c0_i32_0 : i32, i32
  }
  func.func @transform_6(%arg0: i32) -> (i32, i32) {
    %c0_i32 = arith.constant 0 : i32
    %c0_i32_0 = arith.constant 0 : i32
    %c0_i32_1 = arith.constant 0 : i32
    return %c0_i32, %c0_i32_0 : i32, i32
  }
  func.func @transform_7(%arg0: i32) -> (i32, i32) {
    %c0_i32 = arith.constant 0 : i32
    %c0_i32_0 = arith.constant 0 : i32
    %c0_i32_1 = arith.constant 0 : i32
    return %c0_i32, %c0_i32_0 : i32, i32
  }
  func.func @transform_8(%arg0: i32) -> (i32, i32) {
    %c0_i32 = arith.constant 0 : i32
    %c0_i32_0 = arith.constant 0 : i32
    %c0_i32_1 = arith.constant 0 : i32
    return %c0_i32, %c0_i32_0 : i32, i32
  }
  func.func @transform_9(%arg0: i32) -> (i32, i32) {
    %c0_i32 = arith.constant 0 : i32
    %c0_i32_0 = arith.constant 0 : i32
    %c0_i32_1 = arith.constant 0 : i32
    return %c0_i32, %c0_i32_0 : i32, i32
  }
  func.func @transform_10(%arg0: i32) -> (i32, i32, i32) {
    %c0_i32 = arith.constant 0 : i32
    %c0_i32_0 = arith.constant 0 : i32
    %c0_i32_1 = arith.constant 0 : i32
    return %arg0, %c0_i32, %c0_i32_0 : i32, i32, i32
  }
}

</mosaic_0001>

<llo_original>
// kernel: tpu_custom_call.1
$region0: #{tpu_custom_call.1}
  #allocation0 [shape = 'u32[]', space=smem, size = 0x4, offset = 0x4, fixed_abs, tag = 'smem constant byte address 0x4 - core index']
  #allocation1 [shape = 'u32[144,128]{1,0:T(1,128)}', space=vmem, size = 0x12000, scoped, tag = 'internal scratch']
  %s0 = inlined_call_operand.vmem [shape: f32[2,32,256], index: 0, kind: input, shape index: {}]
  %s1 = inlined_call_operand.hbm [shape: f32[2,32,256], index: 1, kind: input, shape index: {}]
  %s2 = inlined_call_operand.vmem [shape: f32[32,2], index: 2, kind: input, shape index: {}]
  %s3 = inlined_call_operand.vmem [shape: f32[1,2], index: 3, kind: input, shape index: {}]
  %s4 = inlined_call_operand.vmem [shape: f32[32,2], index: 4, kind: input, shape index: {}]
  %s5 = inlined_call_operand.vmem [shape: f32[32,1], index: 5, kind: input, shape index: {}]
  %s6 = inlined_call_operand.vmem [shape: f32[32,2], index: 6, kind: input, shape index: {}]
  %s7 = inlined_call_operand.vmem [shape: f32[1,2], index: 7, kind: input, shape index: {}]
  %s8 = inlined_call_operand.vmem [shape: f32[32,2], index: 8, kind: input, shape index: {}]
  %s9 = inlined_call_operand.vmem [shape: f32[32,1], index: 9, kind: input, shape index: {}]
  %s10 = inlined_call_operand.hbm [shape: f32[2,32,256], index: 10, kind: output, shape index: {}]
  %s11 = sld [smem:[#allocation0]]
  $region77: #{tpu_custom_call.1} parent=0
    _
  %s13 = ssub.s32 1, %s11
  %s14 = scalar_select 0, %s13, %s11
  $region1: #{tpu_custom_call.1} parent=0
    #allocation2 [shape = 'u8[65536]{0}', space=vmem, size = 0x10000, scoped, tag = 'input window, operand 1']
    #allocation3 [shape = 's32[2]{0}', space=sflag, size = 0x8, scoped, tag = 'scoped memory for tpu_custom_call.1']
    #allocation4 [shape = 's32[2]{0}', space=sflag, size = 0x8, scoped, tag = 'scoped memory for tpu_custom_call.1']
    #allocation5 [shape = 'u8[65536]{0}', space=vmem, size = 0x10000, scoped, tag = 'output window, operand 0']
    %15 = vsyncpa [#allocation3], 0
    %s16 = scalar_lea.sflag [#allocation3], 1
    %17 = vsyncpa %s16, 0
    %18 = vsyncpa [#allocation4], 0
    %s19 = scalar_lea.sflag [#allocation4], 1
    %20 = vsyncpa %s19, 0
    loop: start=0, step=1, limit=4
    $region2: #{tpu_custom_call.1} parent=1 // loop_pre_header
      _
    $region3: #{tpu_custom_call.1} parent=1 // loop_header
      %s22 = sphi 0, %s26
      %p23 = scmp.ge.s32.totalorder %s22, 4
      %s32 = sphi 0, %s34
      %s35 = sphi 0, %s32
      %s36 = sphi 0, %s35
      %s52 = sphi 0, %s36
      %s58 = sphi 0, %s60
      %s61 = sphi 0, %s58
      %s62 = sphi 0, %s61
      %s78 = sphi 0, %s62
      %s82 = sphi 0, %s82
      %s84 = sphi 0, %s82
      %s85 = sphi 0, %s84
      %s99 = sphi 0, %s85
      %s103 = sphi 0, %s103
      %s105 = sphi 0, %s103
      %s106 = sphi 0, %s105
      %s120 = sphi 0, %s106
      %s124 = sphi 0, %s124
      %s126 = sphi 0, %s124
      %s127 = sphi 0, %s126
      %s141 = sphi 0, %s127
      %s145 = sphi 0, %s145
      %s147 = sphi 0, %s145
      %s148 = sphi 0, %s147
      %s162 = sphi 0, %s148
      %s166 = sphi 0, %s166
      %s168 = sphi 0, %s166
      %s169 = sphi 0, %s168
      %s183 = sphi 0, %s169
      %s187 = sphi 0, %s187
      %s189 = sphi 0, %s187
      %s190 = sphi 0, %s189
      %s204 = sphi 0, %s190
      %s208 = sphi 0, %s208
      %s210 = sphi 0, %s208
      %s211 = sphi 0, %s210
      %s225 = sphi 0, %s211
      %s229 = sphi 0, %s229
      %s231 = sphi 0, %s229
      %s232 = sphi 0, %s231
      %s246 = sphi 0, %s232
      %s252 = sphi 0, %s254
      %s255 = sphi 0, %s252
      %s256 = sphi 0, %s255
      %s272 = sphi 0, %s256
    $region4: #{tpu_custom_call.1} parent=1 // loop_header_branch
      %25 = sbr.rel (%p23) target = $region8
    $region5: #{tpu_custom_call.1} parent=1 // loop_body
      %s27 = ssub.s32 %s22, 1
      %s28 = ssub.s32 %s22, 2
      %s29 = sadd.s32 %s22, 1
      %s30 = ssub.s32 %s22, %s29
      %p31 = scmp.eq.s32.totalorder %s30, 0
      %s33 = sadd.s32 %s32, 1
      %s34 = scalar_select %p31, %s32, %s33
      %p37 = pneg %p31
      %p38 = scmp.eq.s32.totalorder %s22, 1
      %p39 = por %p37, %p38
      %p40 = scmp.ne.s32.totalorder %s32, %s35
      %p41 = scmp.eq.s32.totalorder %s22, 0
      %p42 = por %p40, %p41
      %p43 = scmp.ne.s32.totalorder %s32, %s35
      %p44 = scmp.eq.s32.totalorder %s27, 1
      %p45 = por %p43, %p44
      %p46 = scmp.ne.s32.totalorder %s35, %s36
      %p47 = scmp.eq.s32.totalorder %s27, 0
      %p48 = por %p46, %p47
      %p49 = scmp.ne.s32.totalorder %s35, %s36
      %p50 = scmp.eq.s32.totalorder %s28, 1
      %p51 = por %p49, %p50
      %p53 = scmp.ne.s32.totalorder %s36, %s52
      %p54 = scmp.eq.s32.totalorder %s28, 0
      %p55 = por %p53, %p54
      %s56 = ssub.s32 %s22, %s29
      %p57 = scmp.eq.s32.totalorder %s56, 0
      %s59 = sadd.s32 %s58, 1
      %s60 = scalar_select %p57, %s58, %s59
      %p63 = pneg %p57
      %p64 = scmp.eq.s32.totalorder %s22, 1
      %p65 = por %p63, %p64
      %p66 = scmp.ne.s32.totalorder %s58, %s61
      %p67 = scmp.eq.s32.totalorder %s22, 0
      %p68 = por %p66, %p67
      %p69 = scmp.ne.s32.totalorder %s58, %s61
      %p70 = scmp.eq.s32.totalorder %s27, 1
      %p71 = por %p69, %p70
      %p72 = scmp.ne.s32.totalorder %s61, %s62
      %p73 = scmp.eq.s32.totalorder %s27, 0
      %p74 = por %p72, %p73
      %p75 = scmp.ne.s32.totalorder %s61, %s62
      %p76 = scmp.eq.s32.totalorder %s28, 1
      %p77 = por %p75, %p76
      %p79 = scmp.ne.s32.totalorder %s62, %s78
      %p80 = scmp.eq.s32.totalorder %s28, 0
      %p81 = por %p79, %p80
      %s83 = sadd.s32 %s82, 1
      %p86 = scmp.eq.s32.totalorder %s22, 1
      %p87 = scmp.ne.s32.totalorder %s82, %s84
      %p88 = scmp.eq.s32.totalorder %s22, 0
      %p89 = por %p87, %p88
      %p90 = scmp.ne.s32.totalorder %s82, %s84
      %p91 = scmp.eq.s32.totalorder %s27, 1
      %p92 = por %p90, %p91
      %p93 = scmp.ne.s32.totalorder %s84, %s85
      %p94 = scmp.eq.s32.totalorder %s27, 0
      %p95 = por %p93, %p94
      %p96 = scmp.ne.s32.totalorder %s84, %s85
      %p97 = scmp.eq.s32.totalorder %s28, 1
      %p98 = por %p96, %p97
      %p100 = scmp.ne.s32.totalorder %s85, %s99
      %p101 = scmp.eq.s32.totalorder %s28, 0
      %p102 = por %p100, %p101
      %s104 = sadd.s32 %s103, 1
      %p107 = scmp.eq.s32.totalorder %s22, 1
      %p108 = scmp.ne.s32.totalorder %s103, %s105
      %p109 = scmp.eq.s32.totalorder %s22, 0
      %p110 = por %p108, %p109
      %p111 = scmp.ne.s32.totalorder %s103, %s105
      %p112 = scmp.eq.s32.totalorder %s27, 1
      %p113 = por %p111, %p112
      %p114 = scmp.ne.s32.totalorder %s105, %s106
      %p115 = scmp.eq.s32.totalorder %s27, 0
      %p116 = por %p114, %p115
      %p117 = scmp.ne.s32.totalorder %s105, %s106
      %p118 = scmp.eq.s32.totalorder %s28, 1
      %p119 = por %p117, %p118
      %p121 = scmp.ne.s32.totalorder %s106, %s120
      %p122 = scmp.eq.s32.totalorder %s28, 0
      %p123 = por %p121, %p122
      %s125 = sadd.s32 %s124, 1
      %p128 = scmp.eq.s32.totalorder %s22, 1
      %p129 = scmp.ne.s32.totalorder %s124, %s126
      %p130 = scmp.eq.s32.totalorder %s22, 0
      %p131 = por %p129, %p130
      %p132 = scmp.ne.s32.totalorder %s124, %s126
      %p133 = scmp.eq.s32.totalorder %s27, 1
      %p134 = por %p132, %p133
      %p135 = scmp.ne.s32.totalorder %s126, %s127
      %p136 = scmp.eq.s32.totalorder %s27, 0
      %p137 = por %p135, %p136
      %p138 = scmp.ne.s32.totalorder %s126, %s127
      %p139 = scmp.eq.s32.totalorder %s28, 1
      %p140 = por %p138, %p139
      %p142 = scmp.ne.s32.totalorder %s127, %s141
      %p143 = scmp.eq.s32.totalorder %s28, 0
      %p144 = por %p142, %p143
      %s146 = sadd.s32 %s145, 1
      %p149 = scmp.eq.s32.totalorder %s22, 1
      %p150 = scmp.ne.s32.totalorder %s145, %s147
      %p151 = scmp.eq.s32.totalorder %s22, 0
      %p152 = por %p150, %p151
      %p153 = scmp.ne.s32.totalorder %s145, %s147
      %p154 = scmp.eq.s32.totalorder %s27, 1
      %p155 = por %p153, %p154
      %p156 = scmp.ne.s32.totalorder %s147, %s148
      %p157 = scmp.eq.s32.totalorder %s27, 0
      %p158 = por %p156, %p157
      %p159 = scmp.ne.s32.totalorder %s147, %s148
      %p160 = scmp.eq.s32.totalorder %s28, 1
      %p161 = por %p159, %p160
      %p163 = scmp.ne.s32.totalorder %s148, %s162
      %p164 = scmp.eq.s32.totalorder %s28, 0
      %p165 = por %p163, %p164
      %s167 = sadd.s32 %s166, 1
      %p170 = scmp.eq.s32.totalorder %s22, 1
      %p171 = scmp.ne.s32.totalorder %s166, %s168
      %p172 = scmp.eq.s32.totalorder %s22, 0
      %p173 = por %p171, %p172
      %p174 = scmp.ne.s32.totalorder %s166, %s168
      %p175 = scmp.eq.s32.totalorder %s27, 1
      %p176 = por %p174, %p175
      %p177 = scmp.ne.s32.totalorder %s168, %s169
      %p178 = scmp.eq.s32.totalorder %s27, 0
      %p179 = por %p177, %p178
      %p180 = scmp.ne.s32.totalorder %s168, %s169
      %p181 = scmp.eq.s32.totalorder %s28, 1
      %p182 = por %p180, %p181
      %p184 = scmp.ne.s32.totalorder %s169, %s183
      %p185 = scmp.eq.s32.totalorder %s28, 0
      %p186 = por %p184, %p185
      %s188 = sadd.s32 %s187, 1
      %p191 = scmp.eq.s32.totalorder %s22, 1
      %p192 = scmp.ne.s32.totalorder %s187, %s189
      %p193 = scmp.eq.s32.totalorder %s22, 0
      %p194 = por %p192, %p193
      %p195 = scmp.ne.s32.totalorder %s187, %s189
      %p196 = scmp.eq.s32.totalorder %s27, 1
      %p197 = por %p195, %p196
      %p198 = scmp.ne.s32.totalorder %s189, %s190
      %p199 = scmp.eq.s32.totalorder %s27, 0
      %p200 = por %p198, %p199
      %p201 = scmp.ne.s32.totalorder %s189, %s190
      %p202 = scmp.eq.s32.totalorder %s28, 1
      %p203 = por %p201, %p202
      %p205 = scmp.ne.s32.totalorder %s190, %s204
      %p206 = scmp.eq.s32.totalorder %s28, 0
      %p207 = por %p205, %p206
      %s209 = sadd.s32 %s208, 1
      %p212 = scmp.eq.s32.totalorder %s22, 1
      %p213 = scmp.ne.s32.totalorder %s208, %s210
      %p214 = scmp.eq.s32.totalorder %s22, 0
      %p215 = por %p213, %p214
      %p216 = scmp.ne.s32.totalorder %s208, %s210
      %p217 = scmp.eq.s32.totalorder %s27, 1
      %p218 = por %p216, %p217
      %p219 = scmp.ne.s32.totalorder %s210, %s211
      %p220 = scmp.eq.s32.totalorder %s27, 0
      %p221 = por %p219, %p220
      %p222 = scmp.ne.s32.totalorder %s210, %s211
      %p223 = scmp.eq.s32.totalorder %s28, 1
      %p224 = por %p222, %p223
      %p226 = scmp.ne.s32.totalorder %s211, %s225
      %p227 = scmp.eq.s32.totalorder %s28, 0
      %p228 = por %p226, %p227
      %s230 = sadd.s32 %s229, 1
      %p233 = scmp.eq.s32.totalorder %s22, 1
      %p234 = scmp.ne.s32.totalorder %s229, %s231
      %p235 = scmp.eq.s32.totalorder %s22, 0
      %p236 = por %p234, %p235
      %p237 = scmp.ne.s32.totalorder %s229, %s231
      %p238 = scmp.eq.s32.totalorder %s27, 1
      %p239 = por %p237, %p238
      %p240 = scmp.ne.s32.totalorder %s231, %s232
      %p241 = scmp.eq.s32.totalorder %s27, 0
      %p242 = por %p240, %p241
      %p243 = scmp.ne.s32.totalorder %s231, %s232
      %p244 = scmp.eq.s32.totalorder %s28, 1
      %p245 = por %p243, %p244
      %p247 = scmp.ne.s32.totalorder %s232, %s246
      %p248 = scmp.eq.s32.totalorder %s28, 0
      %p249 = por %p247, %p248
      %s250 = ssub.s32 %s22, %s29
      %p251 = scmp.eq.s32.totalorder %s250, 0
      %s253 = sadd.s32 %s252, 1
      %s254 = scalar_select %p251, %s252, %s253
      %p257 = pneg %p251
      %p258 = scmp.eq.s32.totalorder %s22, 1
      %p259 = por %p257, %p258
      %p260 = scmp.ne.s32.totalorder %s252, %s255
      %p261 = scmp.eq.s32.totalorder %s22, 0
      %p262 = por %p260, %p261
      %p263 = scmp.ne.s32.totalorder %s252, %s255
      %p264 = scmp.eq.s32.totalorder %s27, 1
      %p265 = por %p263, %p264
      %p266 = scmp.ne.s32.totalorder %s255, %s256
      %p267 = scmp.eq.s32.totalorder %s27, 0
      %p268 = por %p266, %p267
      %p269 = scmp.ne.s32.totalorder %s255, %s256
      %p270 = scmp.eq.s32.totalorder %s28, 1
      %p271 = por %p269, %p270
      %p273 = scmp.ne.s32.totalorder %s256, %s272
      %p274 = scmp.eq.s32.totalorder %s28, 0
      %p275 = por %p273, %p274
      %p276 = scmp.le.s32.totalorder 1, %s22
      %p277 = scmp.lt.s32.totalorder %s22, 3
      %p278 = pnand %p276, %p277
      %p279 = pneg %p278
      // Predicated region
      $region9: #{tpu_custom_call.1} parent=5 // pred_check
        _
      $region10: #{tpu_custom_call.1} parent=5 // pred_check_branch
        %281 = sbr.rel (%p278) target = $region12
      $region11: #{tpu_custom_call.1} parent=5 // pred_region
        %s282 = ssub.s32 %s22, 1
        // Predicated region
        $region13: #{tpu_custom_call.1} parent=11 // pred_check
          %p283 = pneg %p95
        $region14: #{tpu_custom_call.1} parent=11 // pred_check_branch
          %285 = sbr.rel (%p283) target = $region16
        $region15: #{tpu_custom_call.1} parent=11 // pred_region
          _
        $region16: #{tpu_custom_call.1} parent=11 // pred_fallthru
          _
        // Predicated region
        $region17: #{tpu_custom_call.1} parent=11 // pred_check
          %p286 = pneg %p116
        $region18: #{tpu_custom_call.1} parent=11 // pred_check_branch
          %288 = sbr.rel (%p286) target = $region20
        $region19: #{tpu_custom_call.1} parent=11 // pred_region
          _
        $region20: #{tpu_custom_call.1} parent=11 // pred_fallthru
          _
        // Predicated region
        $region21: #{tpu_custom_call.1} parent=11 // pred_check
          %p289 = pneg %p137
        $region22: #{tpu_custom_call.1} parent=11 // pred_check_branch
          %291 = sbr.rel (%p289) target = $region24
        $region23: #{tpu_custom_call.1} parent=11 // pred_region
          _
        $region24: #{tpu_custom_call.1} parent=11 // pred_fallthru
          _
        // Predicated region
        $region25: #{tpu_custom_call.1} parent=11 // pred_check
          %p292 = pneg %p158
        $region26: #{tpu_custom_call.1} parent=11 // pred_check_branch
          %294 = sbr.rel (%p292) target = $region28
        $region27: #{tpu_custom_call.1} parent=11 // pred_region
          _
        $region28: #{tpu_custom_call.1} parent=11 // pred_fallthru
          _
        // Predicated region
        $region29: #{tpu_custom_call.1} parent=11 // pred_check
          %p295 = pneg %p179
        $region30: #{tpu_custom_call.1} parent=11 // pred_check_branch
          %297 = sbr.rel (%p295) target = $region32
        $region31: #{tpu_custom_call.1} parent=11 // pred_region
          _
        $region32: #{tpu_custom_call.1} parent=11 // pred_fallthru
          _
        // Predicated region
        $region33: #{tpu_custom_call.1} parent=11 // pred_check
          %p298 = pneg %p200
        $region34: #{tpu_custom_call.1} parent=11 // pred_check_branch
          %300 = sbr.rel (%p298) target = $region36
        $region35: #{tpu_custom_call.1} parent=11 // pred_region
          _
        $region36: #{tpu_custom_call.1} parent=11 // pred_fallthru
          _
        // Predicated region
        $region37: #{tpu_custom_call.1} parent=11 // pred_check
          %p301 = pneg %p221
        $region38: #{tpu_custom_call.1} parent=11 // pred_check_branch
          %303 = sbr.rel (%p301) target = $region40
        $region39: #{tpu_custom_call.1} parent=11 // pred_region
          _
        $region40: #{tpu_custom_call.1} parent=11 // pred_fallthru
          _
        // Predicated region
        $region41: #{tpu_custom_call.1} parent=11 // pred_check
          %p304 = pneg %p242
        $region42: #{tpu_custom_call.1} parent=11 // pred_check_branch
          %306 = sbr.rel (%p304) target = $region44
        $region43: #{tpu_custom_call.1} parent=11 // pred_region
          _
        $region44: #{tpu_custom_call.1} parent=11 // pred_fallthru
          _
      $region12: #{tpu_custom_call.1} parent=5 // pred_fallthru
        _
      %p307 = scmp.lt.s32.totalorder %s22, 2
      // Predicated region
      $region45: #{tpu_custom_call.1} parent=5 // pred_check
        %p308 = pneg %p307
      $region46: #{tpu_custom_call.1} parent=5 // pred_check_branch
        %310 = sbr.rel (%p308) target = $region48
      $region47: #{tpu_custom_call.1} parent=5 // pred_region
        // Predicated region
        $region49: #{tpu_custom_call.1} parent=47 // pred_check
          %p311 = pneg %p42
        $region50: #{tpu_custom_call.1} parent=47 // pred_check_branch
          %313 = sbr.rel (%p311) target = $region52
        $region51: #{tpu_custom_call.1} parent=47 // pred_region
          %p314 = scmp.lt.s32.totalorder %s22, 1
          %s315 = scalar_select %p314, %s22, 1
          %s316 = smul.addr %s315, 8
          %s317 = smul.addr %s316, 8
          %s318 = scalar_lea.vmem %s0, %s317
        $region52: #{tpu_custom_call.1} parent=47 // pred_fallthru
          _
        // Predicated region
        $region53: #{tpu_custom_call.1} parent=47 // pred_check
          %p319 = pneg %p68
        $region54: #{tpu_custom_call.1} parent=47 // pred_check_branch
          %321 = sbr.rel (%p319) target = $region56
        $region55: #{tpu_custom_call.1} parent=47 // pred_region
          %s322 = sand.u32 %s58, 1
          %s323 = scalar_lea.sflag [#allocation3], %s322
          %s324 = sand.u32 %s58, 1
          %s325 = smul.addr %s324, 64
          %s326 = scalar_lea.vmem [#allocation2], %s325
          %s328 = ssub.s32 1024, 1024
          %329 = vsyncadd %s323, %s328
          %s330 = smul.addr %s22, 8
          %s331 = smul.addr %s330, 128
          %s332 = scalar_lea.hbm %s1, %s331
          %s333 = sshll.u32 %s326, 4
          %s334 = int_to_ptr.vmem [resolvable:$true] %s333
          %339 = dma.hbm_to_vmem [thread:$0]  %s332, 1024, %s334, %s323, 256, 256, 16
        $region56: #{tpu_custom_call.1} parent=47 // pred_fallthru
          _
      $region48: #{tpu_custom_call.1} parent=5 // pred_fallthru
        _
      %p340 = scmp.le.s32.totalorder 1, %s22
      %p341 = scmp.lt.s32.totalorder %s22, 3
      %p342 = pnand %p340, %p341
      %p343 = pneg %p342
      // Predicated region
      $region57: #{tpu_custom_call.1} parent=5 // pred_check
        _
      $region58: #{tpu_custom_call.1} parent=5 // pred_check_branch
        %345 = sbr.rel (%p342) target = $region60
      $region59: #{tpu_custom_call.1} parent=5 // pred_region
        %s346 = ssub.s32 %s22, 1
        %s347 = sand.u32 %s61, 1
        %s348 = scalar_lea.sflag [#allocation3], %s347
        %s349 = sand.u32 %s61, 1
        %s350 = smul.addr %s349, 64
        %s351 = scalar_lea.vmem [#allocation2], %s350
        // Predicated region
        $region61: #{tpu_custom_call.1} parent=59 // pred_check
          %p352 = pneg %p74
        $region62: #{tpu_custom_call.1} parent=59 // pred_check_branch
          %354 = sbr.rel (%p352) target = $region64
        $region63: #{tpu_custom_call.1} parent=59 // pred_region
          %355 = dma.done %s348, 1024
        $region64: #{tpu_custom_call.1} parent=59 // pred_fallthru
          _
        %p356 = scmp.lt.s32.totalorder %s27, 1
        %s357 = scalar_select %p356, %s27, 1
        %s358 = smul.addr %s357, 8
        %s359 = smul.addr %s358, 8
        %s360 = scalar_lea.vmem %s0, %s359
        %p361 = pneg %p48
        %p362 = pneg %p45
        %s363 = sand.u32 %s61, 1
        %s364 = scalar_lea.sflag [#allocation3], %s363
        %s365 = sand.u32 %s61, 1
        %s366 = smul.addr %s365, 64
        %s367 = scalar_lea.vmem [#allocation2], %s366
        %p368 = pneg %p74
        %p369 = pneg %p71
        %p370 = pneg %p95
        %p371 = pneg %p92
        %p372 = pneg %p116
        %p373 = pneg %p113
        %p374 = pneg %p137
        %p375 = pneg %p134
        %p376 = pneg %p158
        %p377 = pneg %p155
        %p378 = pneg %p179
        %p379 = pneg %p176
        %p380 = pneg %p200
        %p381 = pneg %p197
        %p382 = pneg %p221
        %p383 = pneg %p218
        %p384 = pneg %p242
        %p385 = pneg %p239
        %p386 = pneg %p268
        %p387 = pneg %p265
        %s388 = sand.u32 %s255, 1
        %s389 = scalar_lea.sflag [#allocation4], %s388
        %s390 = sand.u32 %s255, 1
        %s391 = smul.addr %s390, 64
        %s392 = scalar_lea.vmem [#allocation5], %s391
        %p393 = scmp.lt.s32.totalorder %s27, 1
        %s394 = scalar_select %p393, %s27, 1
        %s395 = smul.addr %s394, 8
        %s396 = smul.addr %s395, 8
        %s397 = scalar_lea.vmem %s0, %s396
        %v398 = vld [vmem:[%s397] sm:$0xff]
        %v399 = vld [vmem:[%s397 + $0x8] sm:$0xff]
        %v400 = vld [vmem:[%s397 + $0x10] sm:$0xff]
        %v401 = vld [vmem:[%s397 + $0x18] sm:$0xff]
        %v402 = vld [vmem:[%s397 + $0x20] sm:$0xff]
        %v403 = vld [vmem:[%s397 + $0x28] sm:$0xff]
        %v404 = vld [vmem:[%s397 + $0x30] sm:$0xff]
        %v405 = vld [vmem:[%s397 + $0x38] sm:$0xff]
        %v406 = vld [vmem:[%s351] sm:$0xff]
        %v407 = vld [vmem:[%s351 + $0x8] sm:$0xff]
        %v408 = vld [vmem:[%s351 + $0x10] sm:$0xff]
        %v409 = vld [vmem:[%s351 + $0x18] sm:$0xff]
        %v410 = vld [vmem:[%s351 + $0x20] sm:$0xff]
        %v411 = vld [vmem:[%s351 + $0x28] sm:$0xff]
        %v412 = vld [vmem:[%s351 + $0x30] sm:$0xff]
        %v413 = vld [vmem:[%s351 + $0x38] sm:$0xff]
        %v414 = vld [vmem:[%s2] sm:$0xff]
        %v415 = vld [vmem:[%s2 + $0x8] sm:$0xff]
        %v416 = vld [vmem:[%s2 + $0x10] sm:$0xff]
        %v417 = vld [vmem:[%s2 + $0x18] sm:$0xff]
        %v418 = vld [vmem:[%s3] sm:$0x1]
        %v419 = vld [vmem:[%s4] sm:$0xff]
        %v420 = vld [vmem:[%s4 + $0x8] sm:$0xff]
        %v421 = vld [vmem:[%s4 + $0x10] sm:$0xff]
        %v422 = vld [vmem:[%s4 + $0x18] sm:$0xff]
        %v423 = vld [vmem:[%s5] sm:$0xff]
        %v424 = vld [vmem:[%s5 + $0x8] sm:$0xff]
        %v425 = vld [vmem:[%s5 + $0x10] sm:$0xff]
        %v426 = vld [vmem:[%s5 + $0x18] sm:$0xff]
        %v427 = vadd.f32 %v398, %v399
        %428 = vadd.xlane.f32.xlu0 %v427
        %v429 = vpop.xlane.xlu0 %428
        %v430 = vadd.f32 %v400, %v401
        %431 = vadd.xlane.f32.xlu0 %v430
        %v432 = vpop.xlane.xlu0 %431
        %v433 = vadd.f32 %v402, %v403
        %434 = vadd.xlane.f32.xlu0 %v433
        %v435 = vpop.xlane.xlu0 %434
        %v436 = vadd.f32 %v404, %v405
        %437 = vadd.xlane.f32.xlu0 %v436
        %v438 = vpop.xlane.xlu0 %437
        %v439 = vrcp.pop 256.0
        %v440 = vmul.f32 %v429, %v439
        %v441 = vmul.f32 %v432, %v439
        %v442 = vmul.f32 %v435, %v439
        %v443 = vmul.f32 %v438, %v439
        %v444 = vmul.f32 %v440, %v414
        %v445 = vmul.f32 %v441, %v415
        %v446 = vmul.f32 %v442, %v416
        %v447 = vmul.f32 %v443, %v417
        %vm448 = vcmask 15360
        %v449 = vsel %vm448, %v444, 0.0
        %v450 = vsel %vm448, %v445, 0.0
        %v451 = vadd.f32 %v449, %v450
        %v452 = vsel %vm448, %v446, 0.0
        %v453 = vadd.f32 %v451, %v452
        %v454 = vsel %vm448, %v447, 0.0
        %v455 = vadd.f32 %v453, %v454
        %v456 = vrot.slane %v455, 4
        %v457 = vadd.f32 %v455, %v456
        %v458 = vrot.slane %v457, 2
        %v459 = vadd.f32 %v457, %v458
        %v460 = vrot.slane %v459, 1
        %v461 = vadd.f32 %v459, %v460
        %v462 = vadd.f32 %v461, %v418
        %v463 = vmax.f32 %v462, 0.0
        %v464 = vlaneseq
        %v465 = vshrl.u32 %v464, 7
        %v466 = vsub.s32 0, %v465
        %v467 = vrot.slane %v463, %v466
        %v468 = vmul.f32 %v467, %v419
        %v469 = vmul.f32 %v467, %v420
        %v470 = vmul.f32 %v467, %v421
        %v471 = vmul.f32 %v467, %v422
        %v472 = vsel %vm448, %v468, 0.0
        %473 = vadd.xlane.f32.xlu0 %v472
        %v474 = vpop.xlane.xlu0 %473
        %v475 = vsel %vm448, %v469, 0.0
        %476 = vadd.xlane.f32.xlu0 %v475
        %v477 = vpop.xlane.xlu0 %476
        %v478 = vsel %vm448, %v470, 0.0
        %479 = vadd.xlane.f32.xlu0 %v478
        %v480 = vpop.xlane.xlu0 %479
        %v481 = vsel %vm448, %v471, 0.0
        %482 = vadd.xlane.f32.xlu0 %v481
        %v483 = vpop.xlane.xlu0 %482
        %v484 = vadd.f32 %v474, %v423
        %v485 = vadd.f32 %v477, %v424
        %v486 = vadd.f32 %v480, %v425
        %v487 = vadd.f32 %v483, %v426
        %v488 = vxor.u32 %v484, 2147483648
        %v489 = vxor.u32 %v485, 2147483648
        %v490 = vxor.u32 %v486, 2147483648
        %v491 = vxor.u32 %v487, 2147483648
        %v492 = vmul.f32 %v488, 1.442695
        %v493 = vpow.pop %v492
        %v494 = vmul.f32 %v489, 1.442695
        %v495 = vpow.pop %v494
        %v496 = vmul.f32 %v490, 1.442695
        %v497 = vpow.pop %v496
        %v498 = vmul.f32 %v491, 1.442695
        %v499 = vpow.pop %v498
        %v500 = vadd.f32 %v493, 1.0
        %v501 = vadd.f32 %v495, 1.0
        %v502 = vadd.f32 %v497, 1.0
        %v503 = vadd.f32 %v499, 1.0
        %v504 = vrcp.pop %v500
        %v505 = vmul.f32 1.0, %v504
        %v506 = vrcp.pop %v501
        %v507 = vmul.f32 1.0, %v506
        %v508 = vrcp.pop %v502
        %v509 = vmul.f32 1.0, %v508
        %v510 = vrcp.pop %v503
        %v511 = vmul.f32 1.0, %v510
        %v512 = vld [vmem:[%s6] sm:$0xff]
        %v513 = vld [vmem:[%s6 + $0x8] sm:$0xff]
        %v514 = vld [vmem:[%s6 + $0x10] sm:$0xff]
        %v515 = vld [vmem:[%s6 + $0x18] sm:$0xff]
        %v516 = vld [vmem:[%s7] sm:$0x1]
        %v517 = vld [vmem:[%s8] sm:$0xff]
        %v518 = vld [vmem:[%s8 + $0x8] sm:$0xff]
        %v519 = vld [vmem:[%s8 + $0x10] sm:$0xff]
        %v520 = vld [vmem:[%s8 + $0x18] sm:$0xff]
        %v521 = vld [vmem:[%s9] sm:$0xff]
        %v522 = vld [vmem:[%s9 + $0x8] sm:$0xff]
        %v523 = vld [vmem:[%s9 + $0x10] sm:$0xff]
        %v524 = vld [vmem:[%s9 + $0x18] sm:$0xff]
        %v525 = vadd.f32 %v406, %v407
        %526 = vadd.xlane.f32.xlu0 %v525
        %v527 = vpop.xlane.xlu0 %526
        %v528 = vadd.f32 %v408, %v409
        %529 = vadd.xlane.f32.xlu0 %v528
        %v530 = vpop.xlane.xlu0 %529
        %v531 = vadd.f32 %v410, %v411
        %532 = vadd.xlane.f32.xlu0 %v531
        %v533 = vpop.xlane.xlu0 %532
        %v534 = vadd.f32 %v412, %v413
        %535 = vadd.xlane.f32.xlu0 %v534
        %v536 = vpop.xlane.xlu0 %535
        %v537 = vmul.f32 %v527, %v439
        %v538 = vmul.f32 %v530, %v439
        %v539 = vmul.f32 %v533, %v439
        %v540 = vmul.f32 %v536, %v439
        %v541 = vmul.f32 %v537, %v512
        %v542 = vmul.f32 %v538, %v513
        %v543 = vmul.f32 %v539, %v514
        %v544 = vmul.f32 %v540, %v515
        %v545 = vsel %vm448, %v541, 0.0
        %v546 = vsel %vm448, %v542, 0.0
        %v547 = vadd.f32 %v545, %v546
        %v548 = vsel %vm448, %v543, 0.0
        %v549 = vadd.f32 %v547, %v548
        %v550 = vsel %vm448, %v544, 0.0
        %v551 = vadd.f32 %v549, %v550
        %v552 = vrot.slane %v551, 4
        %v553 = vadd.f32 %v551, %v552
        %v554 = vrot.slane %v553, 2
        %v555 = vadd.f32 %v553, %v554
        %v556 = vrot.slane %v555, 1
        %v557 = vadd.f32 %v555, %v556
        %v558 = vadd.f32 %v557, %v516
        %v559 = vmax.f32 %v558, 0.0
        %v560 = vlaneseq
        %v561 = vshrl.u32 %v560, 7
        %v562 = vsub.s32 0, %v561
        %v563 = vrot.slane %v559, %v562
        %v564 = vmul.f32 %v563, %v517
        %v565 = vmul.f32 %v563, %v518
        %v566 = vmul.f32 %v563, %v519
        %v567 = vmul.f32 %v563, %v520
        %v568 = vsel %vm448, %v564, 0.0
        %569 = vadd.xlane.f32.xlu0 %v568
        %v570 = vpop.xlane.xlu0 %569
        %v571 = vsel %vm448, %v565, 0.0
        %572 = vadd.xlane.f32.xlu0 %v571
        %v573 = vpop.xlane.xlu0 %572
        %v574 = vsel %vm448, %v566, 0.0
        %575 = vadd.xlane.f32.xlu0 %v574
        %v576 = vpop.xlane.xlu0 %575
        %v577 = vsel %vm448, %v567, 0.0
        %578 = vadd.xlane.f32.xlu0 %v577
        %v579 = vpop.xlane.xlu0 %578
        %v580 = vadd.f32 %v570, %v521
        %v581 = vadd.f32 %v573, %v522
        %v582 = vadd.f32 %v576, %v523
        %v583 = vadd.f32 %v579, %v524
        %v584 = vxor.u32 %v580, 2147483648
        %v585 = vxor.u32 %v581, 2147483648
        %v586 = vxor.u32 %v582, 2147483648
        %v587 = vxor.u32 %v583, 2147483648
        %v588 = vmul.f32 %v584, 1.442695
        %v589 = vpow.pop %v588
        %v590 = vmul.f32 %v585, 1.442695
        %v591 = vpow.pop %v590
        %v592 = vmul.f32 %v586, 1.442695
        %v593 = vpow.pop %v592
        %v594 = vmul.f32 %v587, 1.442695
        %v595 = vpow.pop %v594
        %v596 = vadd.f32 %v589, 1.0
        %v597 = vadd.f32 %v591, 1.0
        %v598 = vadd.f32 %v593, 1.0
        %v599 = vadd.f32 %v595, 1.0
        %v600 = vrcp.pop %v596
        %v601 = vmul.f32 1.0, %v600
        %v602 = vrcp.pop %v597
        %v603 = vmul.f32 1.0, %v602
        %v604 = vrcp.pop %v598
        %v605 = vmul.f32 1.0, %v604
        %v606 = vrcp.pop %v599
        %v607 = vmul.f32 1.0, %v606
        %609 = vset.pattern.permute.xlu0 0
        %610 = vperm.xlu0 %609, %v505
        %v611 = vpop.permute.xlu0 %610
        %614 = vset.pattern.permute.xlu0 0
        %615 = vperm.xlu0 %614, %v507
        %v616 = vpop.permute.xlu0 %615
        %619 = vset.pattern.permute.xlu0 0
        %620 = vperm.xlu0 %619, %v509
        %v621 = vpop.permute.xlu0 %620
        %624 = vset.pattern.permute.xlu0 0
        %625 = vperm.xlu0 %624, %v511
        %v626 = vpop.permute.xlu0 %625
        %v628 = vmul.f32 %v398, %v611
        %v629 = vmul.f32 %v399, %v611
        %v630 = vmul.f32 %v400, %v616
        %v631 = vmul.f32 %v401, %v616
        %v632 = vmul.f32 %v402, %v621
        %v633 = vmul.f32 %v403, %v621
        %v634 = vmul.f32 %v404, %v626
        %v635 = vmul.f32 %v405, %v626
        %637 = vset.pattern.permute.xlu0 0
        %638 = vperm.xlu0 %637, %v601
        %v639 = vpop.permute.xlu0 %638
        %642 = vset.pattern.permute.xlu0 0
        %643 = vperm.xlu0 %642, %v603
        %v644 = vpop.permute.xlu0 %643
        %647 = vset.pattern.permute.xlu0 0
        %648 = vperm.xlu0 %647, %v605
        %v649 = vpop.permute.xlu0 %648
        %652 = vset.pattern.permute.xlu0 0
        %653 = vperm.xlu0 %652, %v607
        %v654 = vpop.permute.xlu0 %653
        %v656 = vmul.f32 %v406, %v639
        %v657 = vmul.f32 %v407, %v639
        %v658 = vmul.f32 %v408, %v644
        %v659 = vmul.f32 %v409, %v644
        %v660 = vmul.f32 %v410, %v649
        %v661 = vmul.f32 %v411, %v649
        %v662 = vmul.f32 %v412, %v654
        %v663 = vmul.f32 %v413, %v654
        %v664 = vadd.f32 %v628, %v656
        %v665 = vadd.f32 %v629, %v657
        %v666 = vadd.f32 %v630, %v658
        %v667 = vadd.f32 %v631, %v659
        %v668 = vadd.f32 %v632, %v660
        %v669 = vadd.f32 %v633, %v661
        %v670 = vadd.f32 %v634, %v662
        %v671 = vadd.f32 %v635, %v663
        %672 = vst [vmem:[%s392] sm:$0xff] %v664
        %673 = vst [vmem:[%s392 + $0x8] sm:$0xff] %v665
        %674 = vst [vmem:[%s392 + $0x10] sm:$0xff] %v666
        %675 = vst [vmem:[%s392 + $0x18] sm:$0xff] %v667
        %676 = vst [vmem:[%s392 + $0x20] sm:$0xff] %v668
        %677 = vst [vmem:[%s392 + $0x28] sm:$0xff] %v669
        %678 = vst [vmem:[%s392 + $0x30] sm:$0xff] %v670
        %679 = vst [vmem:[%s392 + $0x38] sm:$0xff] %v671
        %s680 = sand.u32 %s255, 1
        %s681 = scalar_lea.sflag [#allocation4], %s680
        %s682 = sand.u32 %s255, 1
        %s683 = smul.addr %s682, 64
        %s684 = scalar_lea.vmem [#allocation5], %s683
        // Predicated region
        $region65: #{tpu_custom_call.1} parent=59 // pred_check
          %p685 = pneg %p265
        $region66: #{tpu_custom_call.1} parent=59 // pred_check_branch
          %687 = sbr.rel (%p685) target = $region68
        $region67: #{tpu_custom_call.1} parent=59 // pred_region
          %s689 = ssub.s32 1024, 1024
          %690 = vsyncadd %s681, %s689
          %s691 = smul.addr %s27, 8
          %s692 = smul.addr %s691, 128
          %s693 = scalar_lea.hbm %s10, %s692
          %s694 = sshll.u32 %s684, 4
          %s695 = int_to_ptr.vmem [resolvable:$true] %s694
          %700 = dma.vmem_to_hbm [thread:$0]  %s695, 1024, %s693, %s681, 256, 256, 16
        $region68: #{tpu_custom_call.1} parent=59 // pred_fallthru
          _
      $region60: #{tpu_custom_call.1} parent=5 // pred_fallthru
        _
      %p701 = scmp.le.s32.totalorder 2, %s22
      // Predicated region
      $region69: #{tpu_custom_call.1} parent=5 // pred_check
        %p702 = pneg %p701
      $region70: #{tpu_custom_call.1} parent=5 // pred_check_branch
        %704 = sbr.rel (%p702) target = $region72
      $region71: #{tpu_custom_call.1} parent=5 // pred_region
        %s705 = ssub.s32 %s22, 2
        // Predicated region
        $region73: #{tpu_custom_call.1} parent=71 // pred_check
          %p706 = pneg %p271
        $region74: #{tpu_custom_call.1} parent=71 // pred_check_branch
          %708 = sbr.rel (%p706) target = $region76
        $region75: #{tpu_custom_call.1} parent=71 // pred_region
          %s709 = sand.u32 %s256, 1
          %s710 = scalar_lea.sflag [#allocation4], %s709
          %s711 = sand.u32 %s256, 1
          %s712 = smul.addr %s711, 64
          %s713 = scalar_lea.vmem [#allocation5], %s712
          %714 = dma.done %s710, 1024
        $region76: #{tpu_custom_call.1} parent=71 // pred_fallthru
          _
      $region72: #{tpu_custom_call.1} parent=5 // pred_fallthru
        _
    $region6: #{tpu_custom_call.1} parent=1 // loop_footer
      %s26 = sadd.s32 1, %s22
    $region7: #{tpu_custom_call.1} parent=1 // loop_footer_branch
      %21 = sbr.rel target = $region3
    $region8: #{tpu_custom_call.1} parent=1 // loop_exit
      _
    %715 = vsyncpa [#allocation3], 1
    %s716 = scalar_lea.sflag [#allocation3], 1
    %717 = vsyncpa %s716, 1
    %718 = vsyncpa [#allocation4], 1
    %s719 = scalar_lea.sflag [#allocation4], 1
    %720 = vsyncpa %s719, 1

</llo_original>
